<compile_context>
chip_gen: v6e
topology: v6e:2x2x1
jax: 0.10.0
libtpu: 0.0.40
codegen_flags: <defaults>
</compile_context>

<pallas_src>
import functools

import jax
import jax.numpy as jnp
from jax.experimental import pallas as pl
from jax.experimental.pallas import tpu as pltpu  # noqa: F401  (not needed: no grid/pipeline)

# ------------------------- problem sizes (small) -------------------------
B = 2             # batch
N = 8             # num_patch
D = 32            # input_dim (channels per patch)
TOKEN_DIM = 16    # token-mixing hidden dim
CHANNEL_DIM = 64  # channel-mixing hidden dim
LN_EPS = 1e-5     # PyTorch nn.LayerNorm default
LANES = 128       # TPU lane width


def _gelu_exact(x):
    # PyTorch nn.GELU() default: exact erf-based GELU.
    return 0.5 * x * (1.0 + jax.lax.erf(x * (1.0 / jnp.sqrt(2.0))))


# ------------------------------ kernel -----------------------------------
def mixer_block_kernel(x_ref, slab_ref, o_ref, *, layout):
    B_, N_, D_, T_, C_ = (layout[k] for k in ("B", "N", "D", "T", "C"))
    BN, BT = B_ * N_, B_ * T_
    off = layout["off"]
    ov, obt1, obt2, owt1, owt2, owc1, owc2 = (
        off[k] for k in ("vec", "bt1", "bt2", "wt1", "wt2", "wc1", "wc2"))

    x = x_ref[...]                                  # (B*N, D) f32

    # --- parameter views out of the single slab (static, 8-aligned rows) ---
    g1  = slab_ref[ov + 0:ov + 1, :D_]              # (1, D)
    b1  = slab_ref[ov + 1:ov + 2, :D_]
    g2  = slab_ref[ov + 2:ov + 3, :D_]
    b2  = slab_ref[ov + 3:ov + 4, :D_]
    bc1 = slab_ref[ov + 4:ov + 5, :C_]              # (1, C)
    bc2 = slab_ref[ov + 5:ov + 6, :D_]              # (1, D)
    bt1 = slab_ref[obt1:obt1 + BT, :D_]             # (B*T, D) pre-broadcast
    bt2 = slab_ref[obt2:obt2 + BN, :D_]             # (B*N, D) pre-broadcast
    wt1 = slab_ref[owt1:owt1 + BT, :BN]             # (B*T, B*N) block-diag of wt1.T
    wt2 = slab_ref[owt2:owt2 + BN, :BT]             # (B*N, B*T) block-diag of wt2.T
    wc1 = slab_ref[owc1:owc1 + D_, :C_]             # (D, C)
    wc2 = slab_ref[owc2:owc2 + C_, :D_]             # (C, D)

    inv_d = 1.0 / D_

    def ln(v, g, b):
        # Independent reductions -> shorter XLU-serial chain than mean/center/mean.
        s1 = jnp.sum(v, axis=-1, keepdims=True)
        s2 = jnp.sum(v * v, axis=-1, keepdims=True)
        mu = s1 * inv_d
        var = s2 * inv_d - mu * mu
        return (v - mu) * jax.lax.rsqrt(var + LN_EPS) * g + b

    # ----- token mixer: LN -> MLP over patches (batch folded via block-diag) -----
    y = ln(x, g1, b1)                                                     # (B*N, D)
    h = jnp.dot(wt1, y, preferred_element_type=jnp.float32) + bt1         # (B*T, D)
    h = _gelu_exact(h)
    x = x + jnp.dot(wt2, h, preferred_element_type=jnp.float32) + bt2     # (B*N, D)

    # ----- channel mixer: LN -> MLP over channels -----
    z = ln(x, g2, b2)                                                     # (B*N, D)
    h2 = jnp.dot(z, wc1, preferred_element_type=jnp.float32) + bc1        # (B*N, C)
    h2 = _gelu_exact(h2)
    x = x + jnp.dot(h2, wc2, preferred_element_type=jnp.float32) + bc2    # (B*N, D)

    o_ref[...] = x.astype(o_ref.dtype)              # single slab store


# -------------------------- host-side packing ----------------------------
def _block_diag(w, blocks):
    r, c = w.shape
    out = jnp.zeros((blocks * r, blocks * c), jnp.float32)
    for i in range(blocks):
        out = out.at[i * r:(i + 1) * r, i * c:(i + 1) * c].set(w.astype(jnp.float32))
    return out


def pack_params(p, batch):
    """All weight prep happens here (zero in-kernel cost): transpose + batch
    block-diagonalize the token-mix weights, pre-broadcast the token biases,
    and pack everything into one lane-dense (rows, 128) f32 slab."""
    N_, T_ = p["wt1"].shape          # (N, TOKEN_DIM)
    D_, C_ = p["wc1"].shape          # (D, CHANNEL_DIM)

    def rowvec(v):
        v = v.reshape(-1).astype(jnp.float32)
        return jnp.pad(v, (0, LANES - v.shape[0]))[None, :]

    def pad_block(a):
        a = a.astype(jnp.float32)
        r, c = a.shape
        return jnp.pad(a, ((0, (-r) % 8), (0, LANES - c)))

    vec = jnp.concatenate([
        rowvec(p["ln1_g"]), rowvec(p["ln1_b"]),
        rowvec(p["ln2_g"]), rowvec(p["ln2_b"]),
        rowvec(p["bc1"]), rowvec(p["bc2"]),
        jnp.zeros((2, LANES), jnp.float32),          # pad to 8 rows
    ], axis=0)                                       # (8, 128)

    bt1_big = jnp.tile(jnp.broadcast_to(p["bt1"].reshape(T_, 1), (T_, D_)), (batch, 1))
    bt2_big = jnp.tile(jnp.broadcast_to(p["bt2"].reshape(N_, 1), (N_, D_)), (batch, 1))
    wt1_bd = _block_diag(p["wt1"].T, batch)          # (B*T, B*N)
    wt2_bd = _block_diag(p["wt2"].T, batch)          # (B*N, B*T)

    names = ["vec", "bt1", "bt2", "wt1", "wt2", "wc1", "wc2"]
    blocks = [vec, pad_block(bt1_big), pad_block(bt2_big),
              pad_block(wt1_bd), pad_block(wt2_bd),
              pad_block(p["wc1"]), pad_block(p["wc2"])]

    offsets, rows, off = {}, [], 0
    for name, blk in zip(names, blocks):
        offsets[name] = off
        off += blk.shape[0]
        rows.append(blk)
    slab = jnp.concatenate(rows, axis=0)             # (200, 128) f32, ~100 KB

    layout = dict(B=batch, N=N_, D=D_, T=T_, C=C_, off=offsets)
    return slab, layout


# ------------------------------ wrapper -----------------------------------
def mixer_block(x, slab, layout):
    """x: (B, N, D) float32; slab/layout from pack_params."""
    B_, N_, D_ = x.shape
    x2 = x.reshape(B_ * N_, D_)                      # free: merge leading dims
    out2 = pl.pallas_call(                           # no grid, no pipeline bookkeeping
        functools.partial(mixer_block_kernel, layout=layout),
        out_shape=jax.ShapeDtypeStruct((B_ * N_, D_), x.dtype),
    )(x2, slab)
    return out2.reshape(B_, N_, D_)


# --------------------------- params & reference ---------------------------
def init_params(key):
    ks = jax.random.split(key, 8)
    scale = 0.02
    return {
        "ln1_g": jnp.ones((1, D), jnp.float32),
        "ln1_b": jnp.zeros((1, D), jnp.float32),
        "wt1": scale * jax.random.normal(ks[0], (N, TOKEN_DIM), jnp.float32),
        "bt1": scale * jax.random.normal(ks[1], (1, TOKEN_DIM), jnp.float32),
        "wt2": scale * jax.random.normal(ks[2], (TOKEN_DIM, N), jnp.float32),
        "bt2": scale * jax.random.normal(ks[3], (1, N), jnp.float32),
        "ln2_g": jnp.ones((1, D), jnp.float32),
        "ln2_b": jnp.zeros((1, D), jnp.float32),
        "wc1": scale * jax.random.normal(ks[4], (D, CHANNEL_DIM), jnp.float32),
        "bc1": scale * jax.random.normal(ks[5], (1, CHANNEL_DIM), jnp.float32),
        "wc2": scale * jax.random.normal(ks[6], (CHANNEL_DIM, D), jnp.float32),
        "bc2": scale * jax.random.normal(ks[7], (1, D), jnp.float32),
    }


def mixer_block_ref(x, p):
    """Pure-JAX reference mirroring the PyTorch forward (dropout=0)."""
    def ln(v, g, b):
        mu = jnp.mean(v, axis=-1, keepdims=True)
        var = jnp.mean(jnp.square(v - mu), axis=-1, keepdims=True)
        return (v - mu) * jax.lax.rsqrt(var + LN_EPS) * g + b

    y = ln(x, p["ln1_g"], p["ln1_b"])
    yt = jnp.swapaxes(y, 1, 2)                         # b n d -> b d n
    h = _gelu_exact(yt @ p["wt1"] + p["bt1"])
    tok = h @ p["wt2"] + p["bt2"]
    x = x + jnp.swapaxes(tok, 1, 2)                    # b d n -> b n d
    z = ln(x, p["ln2_g"], p["ln2_b"])
    h2 = _gelu_exact(z @ p["wc1"] + p["bc1"])
    return x + (h2 @ p["wc2"] + p["bc2"])


if __name__ == "__main__":
    key = jax.random.PRNGKey(0)
    kx, kp_key = jax.random.split(key)
    x = jax.random.normal(kx, (B, N, D), jnp.float32)
    params = init_params(kp_key)
    slab, layout = pack_params(params, B)

    out = jax.block_until_ready(mixer_block(x, slab, layout))

    ref = mixer_block_ref(x, params)
    assert out.shape == (B, N, D)
    assert jnp.allclose(out, ref, atol=1e-5, rtol=1e-5), "mismatch vs reference"

    print("KERNEL_OK")
</pallas_src>

<mosaic_0001>
module attributes {stable_mosaic.version = 11 : i64} {
  func.func @mixer_block_kernel(%arg0: memref<16x32xf32, #tpu.memory_space<vmem>>, %arg1: memref<200x128xf32, #tpu.memory_space<vmem>>, %arg2: memref<16x32xf32, #tpu.memory_space<vmem>>) attributes {dimension_semantics = [], scalar_prefetch = 0 : i64, scratch_operands = 0 : i64, tpu.core_type = #tpu.core_type<tc>} {
    %c0 = arith.constant 0 : index
    %c0_0 = arith.constant 0 : index
    %0 = vector.load %arg0[%c0, %c0_0] : memref<16x32xf32, #tpu.memory_space<vmem>>, vector<16x32xf32>
    %c0_1 = arith.constant 0 : index
    %c0_2 = arith.constant 0 : index
    %1 = vector.load %arg1[%c0_1, %c0_2] : memref<200x128xf32, #tpu.memory_space<vmem>>, vector<1x32xf32>
    %c1 = arith.constant 1 : index
    %c0_3 = arith.constant 0 : index
    %2 = vector.load %arg1[%c1, %c0_3] : memref<200x128xf32, #tpu.memory_space<vmem>>, vector<1x32xf32>
    %c2 = arith.constant 2 : index
    %c0_4 = arith.constant 0 : index
    %3 = vector.load %arg1[%c2, %c0_4] : memref<200x128xf32, #tpu.memory_space<vmem>>, vector<1x32xf32>
    %c3 = arith.constant 3 : index
    %c0_5 = arith.constant 0 : index
    %4 = vector.load %arg1[%c3, %c0_5] : memref<200x128xf32, #tpu.memory_space<vmem>>, vector<1x32xf32>
    %c4 = arith.constant 4 : index
    %c0_6 = arith.constant 0 : index
    %5 = vector.load %arg1[%c4, %c0_6] : memref<200x128xf32, #tpu.memory_space<vmem>>, vector<1x64xf32>
    %c5 = arith.constant 5 : index
    %c0_7 = arith.constant 0 : index
    %6 = vector.load %arg1[%c5, %c0_7] : memref<200x128xf32, #tpu.memory_space<vmem>>, vector<1x32xf32>
    %c8 = arith.constant 8 : index
    %c0_8 = arith.constant 0 : index
    %7 = vector.load %arg1[%c8, %c0_8] : memref<200x128xf32, #tpu.memory_space<vmem>>, vector<32x32xf32>
    %c40 = arith.constant 40 : index
    %c0_9 = arith.constant 0 : index
    %8 = vector.load %arg1[%c40, %c0_9] : memref<200x128xf32, #tpu.memory_space<vmem>>, vector<16x32xf32>
    %c56 = arith.constant 56 : index
    %c0_10 = arith.constant 0 : index
    %9 = vector.load %arg1[%c56, %c0_10] : memref<200x128xf32, #tpu.memory_space<vmem>>, vector<32x16xf32>
    %c88 = arith.constant 88 : index
    %c0_11 = arith.constant 0 : index
    %10 = vector.load %arg1[%c88, %c0_11] : memref<200x128xf32, #tpu.memory_space<vmem>>, vector<16x32xf32>
    %c104 = arith.constant 104 : index
    %c0_12 = arith.constant 0 : index
    %11 = vector.load %arg1[%c104, %c0_12] : memref<200x128xf32, #tpu.memory_space<vmem>>, vector<32x64xf32>
    %c136 = arith.constant 136 : index
    %c0_13 = arith.constant 0 : index
    %12 = vector.load %arg1[%c136, %c0_13] : memref<200x128xf32, #tpu.memory_space<vmem>>, vector<64x32xf32>
    %cst = arith.constant dense<0.000000e+00> : vector<16xf32>
    %13 = vector.multi_reduction <add>, %0, %cst [1] : vector<16x32xf32> to vector<16xf32>
    %14 = vector.shape_cast %13 : vector<16xf32> to vector<16x1xf32>
    %15 = arith.mulf %0, %0 : vector<16x32xf32>
    %cst_14 = arith.constant dense<0.000000e+00> : vector<16xf32>
    %16 = vector.multi_reduction <add>, %15, %cst_14 [1] : vector<16x32xf32> to vector<16xf32>
    %17 = vector.shape_cast %16 : vector<16xf32> to vector<16x1xf32>
    %cst_15 = arith.constant 3.125000e-02 : f32
    %18 = vector.broadcast %cst_15 : f32 to vector<16x1xf32>
    %19 = arith.mulf %14, %18 : vector<16x1xf32>
    %cst_16 = arith.constant 3.125000e-02 : f32
    %20 = vector.broadcast %cst_16 : f32 to vector<16x1xf32>
    %21 = arith.mulf %17, %20 : vector<16x1xf32>
    %22 = arith.mulf %19, %19 : vector<16x1xf32>
    %23 = arith.subf %21, %22 : vector<16x1xf32>
    %24 = vector.broadcast %19 : vector<16x1xf32> to vector<16x32xf32>
    %25 = arith.subf %0, %24 : vector<16x32xf32>
    %cst_17 = arith.constant 9.99999974E-6 : f32
    %26 = vector.broadcast %cst_17 : f32 to vector<16x1xf32>
    %27 = arith.addf %23, %26 : vector<16x1xf32>
    %28 = math.rsqrt %27 : vector<16x1xf32>
    %29 = vector.broadcast %28 : vector<16x1xf32> to vector<16x32xf32>
    %30 = arith.mulf %25, %29 : vector<16x32xf32>
    %31 = vector.broadcast %1 : vector<1x32xf32> to vector<16x32xf32>
    %32 = arith.mulf %30, %31 : vector<16x32xf32>
    %33 = vector.broadcast %2 : vector<1x32xf32> to vector<16x32xf32>
    %34 = arith.addf %32, %33 : vector<16x32xf32>
    %cst_18 = arith.constant dense<0.000000e+00> : vector<32x32xf32>
    %35 = tpu.matmul %9, %34, %cst_18 {dimension_numbers = #tpu.dot_dimension_numbers<[1], [0], [0], [1], [0, 0, 1, 1], [], []>} : vector<32x16xf32>, vector<16x32xf32>, vector<32x32xf32> -> vector<32x32xf32>
    %36 = arith.addf %35, %7 : vector<32x32xf32>
    %cst_19 = arith.constant 5.000000e-01 : f32
    %37 = vector.broadcast %cst_19 : f32 to vector<32x32xf32>
    %38 = arith.mulf %37, %36 : vector<32x32xf32>
    %cst_20 = arith.constant 2.000000e+00 : f32
    %39 = math.sqrt %cst_20 : f32
    %cst_21 = arith.constant 1.000000e+00 : f32
    %40 = arith.divf %cst_21, %39 : f32
    %41 = vector.broadcast %40 : f32 to vector<32x32xf32>
    %42 = arith.mulf %36, %41 : vector<32x32xf32>
    %43 = math.erf %42 : vector<32x32xf32>
    %cst_22 = arith.constant 1.000000e+00 : f32
    %44 = vector.broadcast %cst_22 : f32 to vector<32x32xf32>
    %45 = arith.addf %44, %43 : vector<32x32xf32>
    %46 = arith.mulf %38, %45 : vector<32x32xf32>
    %cst_23 = arith.constant dense<0.000000e+00> : vector<16x32xf32>
    %47 = tpu.matmul %10, %46, %cst_23 {dimension_numbers = #tpu.dot_dimension_numbers<[1], [0], [0], [1], [0, 0, 1, 1], [], []>} : vector<16x32xf32>, vector<32x32xf32>, vector<16x32xf32> -> vector<16x32xf32>
    %48 = arith.addf %0, %47 : vector<16x32xf32>
    %49 = arith.addf %48, %8 : vector<16x32xf32>
    %cst_24 = arith.constant dense<0.000000e+00> : vector<16xf32>
    %50 = vector.multi_reduction <add>, %49, %cst_24 [1] : vector<16x32xf32> to vector<16xf32>
    %51 = vector.shape_cast %50 : vector<16xf32> to vector<16x1xf32>
    %52 = arith.mulf %49, %49 : vector<16x32xf32>
    %cst_25 = arith.constant dense<0.000000e+00> : vector<16xf32>
    %53 = vector.multi_reduction <add>, %52, %cst_25 [1] : vector<16x32xf32> to vector<16xf32>
    %54 = vector.shape_cast %53 : vector<16xf32> to vector<16x1xf32>
    %cst_26 = arith.constant 3.125000e-02 : f32
    %55 = vector.broadcast %cst_26 : f32 to vector<16x1xf32>
    %56 = arith.mulf %51, %55 : vector<16x1xf32>
    %cst_27 = arith.constant 3.125000e-02 : f32
    %57 = vector.broadcast %cst_27 : f32 to vector<16x1xf32>
    %58 = arith.mulf %54, %57 : vector<16x1xf32>
    %59 = arith.mulf %56, %56 : vector<16x1xf32>
    %60 = arith.subf %58, %59 : vector<16x1xf32>
    %61 = vector.broadcast %56 : vector<16x1xf32> to vector<16x32xf32>
    %62 = arith.subf %49, %61 : vector<16x32xf32>
    %cst_28 = arith.constant 9.99999974E-6 : f32
    %63 = vector.broadcast %cst_28 : f32 to vector<16x1xf32>
    %64 = arith.addf %60, %63 : vector<16x1xf32>
    %65 = math.rsqrt %64 : vector<16x1xf32>
    %66 = vector.broadcast %65 : vector<16x1xf32> to vector<16x32xf32>
    %67 = arith.mulf %62, %66 : vector<16x32xf32>
    %68 = vector.broadcast %3 : vector<1x32xf32> to vector<16x32xf32>
    %69 = arith.mulf %67, %68 : vector<16x32xf32>
    %70 = vector.broadcast %4 : vector<1x32xf32> to vector<16x32xf32>
    %71 = arith.addf %69, %70 : vector<16x32xf32>
    %cst_29 = arith.constant dense<0.000000e+00> : vector<16x64xf32>
    %72 = tpu.matmul %71, %11, %cst_29 {dimension_numbers = #tpu.dot_dimension_numbers<[1], [0], [0], [1], [0, 0, 1, 1], [], []>} : vector<16x32xf32>, vector<32x64xf32>, vector<16x64xf32> -> vector<16x64xf32>
    %73 = vector.broadcast %5 : vector<1x64xf32> to vector<16x64xf32>
    %74 = arith.addf %72, %73 : vector<16x64xf32>
    %cst_30 = arith.constant 5.000000e-01 : f32
    %75 = vector.broadcast %cst_30 : f32 to vector<16x64xf32>
    %76 = arith.mulf %75, %74 : vector<16x64xf32>
    %cst_31 = arith.constant 2.000000e+00 : f32
    %77 = math.sqrt %cst_31 : f32
    %cst_32 = arith.constant 1.000000e+00 : f32
    %78 = arith.divf %cst_32, %77 : f32
    %79 = vector.broadcast %78 : f32 to vector<16x64xf32>
    %80 = arith.mulf %74, %79 : vector<16x64xf32>
    %81 = math.erf %80 : vector<16x64xf32>
    %cst_33 = arith.constant 1.000000e+00 : f32
    %82 = vector.broadcast %cst_33 : f32 to vector<16x64xf32>
    %83 = arith.addf %82, %81 : vector<16x64xf32>
    %84 = arith.mulf %76, %83 : vector<16x64xf32>
    %cst_34 = arith.constant dense<0.000000e+00> : vector<16x32xf32>
    %85 = tpu.matmul %84, %12, %cst_34 {dimension_numbers = #tpu.dot_dimension_numbers<[1], [0], [0], [1], [0, 0, 1, 1], [], []>} : vector<16x64xf32>, vector<64x32xf32>, vector<16x32xf32> -> vector<16x32xf32>
    %86 = arith.addf %49, %85 : vector<16x32xf32>
    %87 = vector.broadcast %6 : vector<1x32xf32> to vector<16x32xf32>
    %88 = arith.addf %86, %87 : vector<16x32xf32>
    %c0_35 = arith.constant 0 : index
    %c0_36 = arith.constant 0 : index
    %89 = vector.load %arg2[%c0_35, %c0_36] : memref<16x32xf32, #tpu.memory_space<vmem>>, vector<16x32xf32>
    tpu.vector_store %arg2[%c0_35, %c0_36], %88 {strides = array<i32>} : memref<16x32xf32, #tpu.memory_space<vmem>>, vector<16x32xf32>,
    return
  }
}

</mosaic_0001>

<llo_original>
// kernel: tpu_custom_call.1
$region0: #{tpu_custom_call.1}
  #allocation0 [shape = 'u32[]', space=smem, size = 0x4, offset = 0x4, fixed_abs, tag = 'smem constant byte address 0x4 - core index']
  #allocation1 [shape = 'u32[144,128]{1,0:T(1,128)}', space=vmem, size = 0x12000, scoped, tag = 'internal scratch']
  %s0 = inlined_call_operand.hbm [shape: f32[16,32], index: 0, kind: input, shape index: {}]
  %s1 = inlined_call_operand.hbm [shape: f32[200,128], index: 1, kind: input, shape index: {}]
  %s2 = inlined_call_operand.hbm [shape: f32[16,32], index: 2, kind: output, shape index: {}]
  %s3 = sld [smem:[#allocation0]]
  $region26: #{tpu_custom_call.1} parent=0
    _
  %s5 = ssub.s32 1, %s3
  %s6 = scalar_select 0, %s5, %s3
  $region1: #{tpu_custom_call.1} parent=0
    #allocation2 [shape = 'u8[8192]{0}', space=vmem, size = 0x2000, scoped, tag = 'input window, operand 0, single buffered']
    #allocation3 [shape = 's32[1]{0}', space=sflag, size = 0x4, scoped, tag = 'scoped memory for tpu_custom_call.1']
    #allocation4 [shape = 's32[1]{0}', space=sflag, size = 0x4, scoped, tag = 'scoped memory for tpu_custom_call.1']
    #allocation5 [shape = 'u8[102400]{0}', space=vmem, size = 0x19000, scoped, tag = 'input window, operand 1, single buffered']
    #allocation6 [shape = 's32[1]{0}', space=sflag, size = 0x4, scoped, tag = 'scoped memory for tpu_custom_call.1']
    #allocation7 [shape = 'u8[8192]{0}', space=vmem, size = 0x2000, scoped, tag = 'output window, operand 0, single buffered']
    %7 = vsyncpa [#allocation3], 0
    %8 = vsyncpa [#allocation6], 0
    %9 = vsyncpa [#allocation4], 0
    // Predicated region
    $region2: #{tpu_custom_call.1} parent=1 // pred_check
      _
    $region3: #{tpu_custom_call.1} parent=1 // pred_check_branch
      %11 = sbr.rel (0) target = $region5
    $region4: #{tpu_custom_call.1} parent=1 // pred_region
      %s13 = ssub.s32 256, 256
      %14 = vsyncadd [#allocation3], %s13
      %s15 = sshll.u32 [#allocation2], 4
      %s16 = int_to_ptr.vmem [resolvable:$true] %s15
      %21 = dma.hbm_to_vmem [thread:$0]  %s0, 256, %s16, [#allocation3], 128, 128, 8
    $region5: #{tpu_custom_call.1} parent=1 // pred_fallthru
      _
    // Predicated region
    $region6: #{tpu_custom_call.1} parent=1 // pred_check
      _
    $region7: #{tpu_custom_call.1} parent=1 // pred_check_branch
      %23 = sbr.rel (0) target = $region9
    $region8: #{tpu_custom_call.1} parent=1 // pred_region
      %s25 = ssub.s32 3200, 3200
      %26 = vsyncadd [#allocation6], %s25
      %s27 = sshll.u32 [#allocation5], 4
      %s28 = int_to_ptr.vmem [resolvable:$true] %s27
      %33 = dma.hbm_to_vmem [thread:$0]  %s1, 3200, %s28, [#allocation6], 128, 128, 8
    $region9: #{tpu_custom_call.1} parent=1 // pred_fallthru
      _
    // Predicated region
    $region10: #{tpu_custom_call.1} parent=1 // pred_check
      _
    $region11: #{tpu_custom_call.1} parent=1 // pred_check_branch
      %35 = sbr.rel (0) target = $region13
    $region12: #{tpu_custom_call.1} parent=1 // pred_region
      %36 = dma.done [#allocation3], 256
    $region13: #{tpu_custom_call.1} parent=1 // pred_fallthru
      _
    // Predicated region
    $region14: #{tpu_custom_call.1} parent=1 // pred_check
      _
    $region15: #{tpu_custom_call.1} parent=1 // pred_check_branch
      %38 = sbr.rel (0) target = $region17
    $region16: #{tpu_custom_call.1} parent=1 // pred_region
      %39 = dma.done [#allocation6], 3200
    $region17: #{tpu_custom_call.1} parent=1 // pred_fallthru
      _
    %v40 = vld [vmem:[#allocation2] sm:$0xff]
    %v41 = vld [vmem:[#allocation2 + $0x8] sm:$0xff]
    %v42 = vld [vmem:[#allocation5] sm:$0x1]
    %v43 = vld [vmem:[#allocation5 + $0x1] sm:$0x1]
    %v44 = vld [vmem:[#allocation5 + $0x2] sm:$0x1]
    %v45 = vld [vmem:[#allocation5 + $0x3] sm:$0x1]
    %v46 = vld [vmem:[#allocation5 + $0x4] sm:$0x1]
    %v47 = vld [vmem:[#allocation5 + $0x5] sm:$0x1]
    %v48 = vld [vmem:[#allocation5 + $0x8] sm:$0xff]
    %v49 = vld [vmem:[#allocation5 + $0x10] sm:$0xff]
    %v50 = vld [vmem:[#allocation5 + $0x18] sm:$0xff]
    %v51 = vld [vmem:[#allocation5 + $0x20] sm:$0xff]
    %v52 = vld [vmem:[#allocation5 + $0x28] sm:$0xff]
    %v53 = vld [vmem:[#allocation5 + $0x30] sm:$0xff]
    %v54 = vld [vmem:[#allocation5 + $0x38] sm:$0xff]
    %v55 = vld [vmem:[#allocation5 + $0x40] sm:$0xff]
    %v56 = vld [vmem:[#allocation5 + $0x48] sm:$0xff]
    %v57 = vld [vmem:[#allocation5 + $0x50] sm:$0xff]
    %v58 = vld [vmem:[#allocation5 + $0x58] sm:$0xff]
    %v59 = vld [vmem:[#allocation5 + $0x60] sm:$0xff]
    %v60 = vld [vmem:[#allocation5 + $0x68] sm:$0xff]
    %v61 = vld [vmem:[#allocation5 + $0x70] sm:$0xff]
    %v62 = vld [vmem:[#allocation5 + $0x78] sm:$0xff]
    %v63 = vld [vmem:[#allocation5 + $0x80] sm:$0xff]
    %v64 = vld [vmem:[#allocation5 + $0x88] sm:$0xff]
    %v65 = vld [vmem:[#allocation5 + $0x90] sm:$0xff]
    %v66 = vld [vmem:[#allocation5 + $0x98] sm:$0xff]
    %v67 = vld [vmem:[#allocation5 + $0xa0] sm:$0xff]
    %v68 = vld [vmem:[#allocation5 + $0xa8] sm:$0xff]
    %v69 = vld [vmem:[#allocation5 + $0xb0] sm:$0xff]
    %v70 = vld [vmem:[#allocation5 + $0xb8] sm:$0xff]
    %v71 = vld [vmem:[#allocation5 + $0xc0] sm:$0xff]
    %vm72 = vcmask 261120
    %v73 = vsel %vm72, %v40, 0.0
    %74 = vadd.xlane.f32.xlu0 %v73
    %v75 = vpop.xlane.xlu0 %74
    %v76 = vsel %vm72, %v41, 0.0
    %77 = vadd.xlane.f32.xlu0 %v76
    %v78 = vpop.xlane.xlu0 %77
    %v79 = vmul.f32 %v40, %v40
    %v80 = vmul.f32 %v41, %v41
    %v81 = vsel %vm72, %v79, 0.0
    %82 = vadd.xlane.f32.xlu0 %v81
    %v83 = vpop.xlane.xlu0 %82
    %v84 = vsel %vm72, %v80, 0.0
    %85 = vadd.xlane.f32.xlu0 %v84
    %v86 = vpop.xlane.xlu0 %85
    %v87 = vmul.f32 %v75, 0.03125
    %v88 = vmul.f32 %v78, 0.03125
    %v89 = vmul.f32 %v83, 0.03125
    %v90 = vmul.f32 %v86, 0.03125
    %v91 = vmul.f32 %v87, %v87
    %v92 = vmul.f32 %v88, %v88
    %v93 = vsub.f32 %v89, %v91
    %v94 = vsub.f32 %v90, %v92
    %v95 = vsub.f32 %v40, %v87
    %v96 = vsub.f32 %v41, %v88
    %v97 = vadd.f32 %v93, 1e-05
    %v98 = vadd.f32 %v94, 1e-05
    %v99 = vrsqrt.pop %v97
    %v100 = vrsqrt.pop %v98
    %v101 = vmul.f32 %v95, %v99
    %v102 = vmul.f32 %v96, %v100
    %v103 = vlaneseq
    %v104 = vshrl.u32 %v103, 7
    %v105 = vsub.s32 0, %v104
    %v106 = vrot.slane %v42, %v105
    %v107 = vmul.f32 %v101, %v106
    %v108 = vmul.f32 %v102, %v106
    %v109 = vlaneseq
    %v110 = vshrl.u32 %v109, 7
    %v111 = vsub.s32 0, %v110
    %v112 = vrot.slane %v43, %v111
    %v113 = vadd.f32 %v107, %v112
    %v114 = vadd.f32 %v108, %v112
    %vm115 = vcmask 130048
    %v117 = vsel %vm115, %v54, 0
    %v120 = vsel %vm115, %v55, 0
    %v123 = vsel %vm115, %v56, 0
    %v126 = vsel %vm115, %v57, 0
    %128 = vmatprep.subr.mxu0 0.0
    %129 = vmatpush1.msra.mxu0 0.0
    %130 = vmatprep.subr.mxu0 0.0
    %131 = vmatpush1.msra.mxu0 0.0
    %132 = vmatprep.subr.mxu0 0.0
    %133 = vmatpush1.msra.mxu0 0.0
    %134 = vmatprep.subr.mxu0 0.0
    %135 = vmatpush1.msra.mxu0 0.0
    %136 = vmatprep.subr.mxu0 0.0
    %137 = vmatpush1.msra.mxu0 0.0
    %138 = vmatprep.subr.mxu0 0.0
    %139 = vmatpush1.msra.mxu0 0.0
    %140 = vmatprep.subr.mxu0 0.0
    %141 = vmatpush1.msra.mxu0 0.0
    %142 = vmatprep.subr.mxu0 0.0
    %143 = vmatpush1.msra.mxu0 0.0
    %144 = vmatprep.subr.mxu0 0.0
    %145 = vmatpush1.msra.mxu0 0.0
    %146 = vmatprep.subr.mxu0 0.0
    %147 = vmatpush1.msra.mxu0 0.0
    %148 = vmatprep.subr.mxu0 0.0
    %149 = vmatpush1.msra.mxu0 0.0
    %150 = vmatprep.subr.mxu0 0.0
    %151 = vmatpush1.msra.mxu0 0.0
    %152 = vmatprep.subr.mxu0 0.0
    %153 = vmatpush1.msra.mxu0 0.0
    %154 = vmatprep.subr.mxu0 0.0
    %155 = vmatpush1.msra.mxu0 0.0
    %156 = vmatprep.subr.mxu0 0.0
    %157 = vmatpush1.msra.mxu0 %v114
    %158 = vmatprep.subr.mxu0 0.0
    %159 = vmatpush1.msra.mxu0 %v113
    %160 = vmatprep.subr.mxu0 0.0
    %161 = vmatpush2.msra.mxu0 0.0
    %162 = vmatprep.subr.mxu0 0.0
    %163 = vmatpush2.msra.mxu0 0.0
    %164 = vmatprep.subr.mxu0 0.0
    %165 = vmatpush2.msra.mxu0 0.0
    %166 = vmatprep.subr.mxu0 0.0
    %167 = vmatpush2.msra.mxu0 0.0
    %168 = vmatprep.subr.mxu0 0.0
    %169 = vmatpush2.msra.mxu0 0.0
    %170 = vmatprep.subr.mxu0 0.0
    %171 = vmatpush2.msra.mxu0 0.0
    %172 = vmatprep.subr.mxu0 0.0
    %173 = vmatpush2.msra.mxu0 0.0
    %174 = vmatprep.subr.mxu0 0.0
    %175 = vmatpush2.msra.mxu0 0.0
    %176 = vmatprep.subr.mxu0 0.0
    %177 = vmatpush2.msra.mxu0 0.0
    %178 = vmatprep.subr.mxu0 0.0
    %179 = vmatpush2.msra.mxu0 0.0
    %180 = vmatprep.subr.mxu0 0.0
    %181 = vmatpush2.msra.mxu0 0.0
    %182 = vmatprep.subr.mxu0 0.0
    %183 = vmatpush2.msra.mxu0 0.0
    %184 = vmatprep.subr.mxu0 0.0
    %185 = vmatpush2.msra.mxu0 0.0
    %186 = vmatprep.subr.mxu0 0.0
    %187 = vmatpush2.msra.mxu0 0.0
    %188 = vmatprep.subr.mxu0 0.0
    %189 = vmatpush2.msra.mxu0 0.0
    %190 = vmatprep.subr.mxu0 0.0
    %191 = vmatpush2.msra.mxu0 0.0
    %192 = vmatprep.mubr.f32.mxu0 0.0
    %193 = vmatmul.mubr.f32.gmra.mxu0 %v117
    %v194 = vpop.f32.mrf.mxu0
    %v195 = vadd.f32 %v48, %v194
    %v196 = vpop.f32.mrf.mxu0
    %197 = vmatprep.mubr.f32.mxu0 0.0
    %198 = vmatmul.mubr.f32.gmra.mxu0 %v120
    %v199 = vpop.f32.mrf.mxu0
    %v200 = vadd.f32 %v49, %v199
    %v201 = vpop.f32.mrf.mxu0
    %202 = vmatprep.mubr.f32.mxu0 0.0
    %203 = vmatmul.mubr.f32.gmra.mxu0 %v123
    %v204 = vpop.f32.mrf.mxu0
    %v205 = vadd.f32 %v50, %v204
    %v206 = vpop.f32.mrf.mxu0
    %207 = vmatprep.mubr.f32.mxu0 0.0
    %208 = vmatmul.mubr.f32.gmra.mxu0 %v126
    %v209 = vpop.f32.mrf.mxu0
    %v210 = vadd.f32 %v51, %v209
    %v211 = vpop.f32.mrf.mxu0
    %212 = vdwg.mxu0
    %v213 = vmul.f32 %v195, 0.5
    %v214 = vmul.f32 %v200, 0.5
    %v215 = vmul.f32 %v205, 0.5
    %v216 = vmul.f32 %v210, 0.5
    %v217 = vmul.f32 %v195, 0.70710677
    %v218 = vmul.f32 %v200, 0.70710677
    %v219 = vmul.f32 %v205, 0.70710677
    %v220 = vmul.f32 %v210, 0.70710677
    %v221 = verf.f32.pop %v217
    %v222 = verf.f32.pop %v218
    %v223 = verf.f32.pop %v219
    %v224 = verf.f32.pop %v220
    %v225 = vadd.f32 %v221, 1.0
    %v226 = vadd.f32 %v222, 1.0
    %v227 = vadd.f32 %v223, 1.0
    %v228 = vadd.f32 %v224, 1.0
    %v229 = vmul.f32 %v213, %v225
    %v230 = vmul.f32 %v214, %v226
    %v231 = vmul.f32 %v215, %v227
    %v232 = vmul.f32 %v216, %v228
    %v234 = vsel %vm72, %v58, 0
    %v237 = vsel %vm72, %v59, 0
    %239 = vmatprep.subr.mxu0 0.0
    %240 = vmatpush1.msra.mxu0 0.0
    %241 = vmatprep.subr.mxu0 0.0
    %242 = vmatpush1.msra.mxu0 0.0
    %243 = vmatprep.subr.mxu0 0.0
    %244 = vmatpush1.msra.mxu0 0.0
    %245 = vmatprep.subr.mxu0 0.0
    %246 = vmatpush1.msra.mxu0 0.0
    %247 = vmatprep.subr.mxu0 0.0
    %248 = vmatpush1.msra.mxu0 0.0
    %249 = vmatprep.subr.mxu0 0.0
    %250 = vmatpush1.msra.mxu0 0.0
    %251 = vmatprep.subr.mxu0 0.0
    %252 = vmatpush1.msra.mxu0 0.0
    %253 = vmatprep.subr.mxu0 0.0
    %254 = vmatpush1.msra.mxu0 0.0
    %255 = vmatprep.subr.mxu0 0.0
    %256 = vmatpush1.msra.mxu0 0.0
    %257 = vmatprep.subr.mxu0 0.0
    %258 = vmatpush1.msra.mxu0 0.0
    %259 = vmatprep.subr.mxu0 0.0
    %260 = vmatpush1.msra.mxu0 0.0
    %261 = vmatprep.subr.mxu0 0.0
    %262 = vmatpush1.msra.mxu0 0.0
    %263 = vmatprep.subr.mxu0 0.0
    %264 = vmatpush1.msra.mxu0 %v232
    %265 = vmatprep.subr.mxu0 0.0
    %266 = vmatpush1.msra.mxu0 %v231
    %267 = vmatprep.subr.mxu0 0.0
    %268 = vmatpush1.msra.mxu0 %v230
    %269 = vmatprep.subr.mxu0 0.0
    %270 = vmatpush1.msra.mxu0 %v229
    %271 = vmatprep.subr.mxu0 0.0
    %272 = vmatpush2.msra.mxu0 0.0
    %273 = vmatprep.subr.mxu0 0.0
    %274 = vmatpush2.msra.mxu0 0.0
    %275 = vmatprep.subr.mxu0 0.0
    %276 = vmatpush2.msra.mxu0 0.0
    %277 = vmatprep.subr.mxu0 0.0
    %278 = vmatpush2.msra.mxu0 0.0
    %279 = vmatprep.subr.mxu0 0.0
    %280 = vmatpush2.msra.mxu0 0.0
    %281 = vmatprep.subr.mxu0 0.0
    %282 = vmatpush2.msra.mxu0 0.0
    %283 = vmatprep.subr.mxu0 0.0
    %284 = vmatpush2.msra.mxu0 0.0
    %285 = vmatprep.subr.mxu0 0.0
    %286 = vmatpush2.msra.mxu0 0.0
    %287 = vmatprep.subr.mxu0 0.0
    %288 = vmatpush2.msra.mxu0 0.0
    %289 = vmatprep.subr.mxu0 0.0
    %290 = vmatpush2.msra.mxu0 0.0
    %291 = vmatprep.subr.mxu0 0.0
    %292 = vmatpush2.msra.mxu0 0.0
    %293 = vmatprep.subr.mxu0 0.0
    %294 = vmatpush2.msra.mxu0 0.0
    %295 = vmatprep.subr.mxu0 0.0
    %296 = vmatpush2.msra.mxu0 0.0
    %297 = vmatprep.subr.mxu0 0.0
    %298 = vmatpush2.msra.mxu0 0.0
    %299 = vmatprep.subr.mxu0 0.0
    %300 = vmatpush2.msra.mxu0 0.0
    %301 = vmatprep.subr.mxu0 0.0
    %302 = vmatpush2.msra.mxu0 0.0
    %303 = vmatprep.mubr.f32.mxu0 0.0
    %304 = vmatmul.mubr.f32.gmra.mxu0 %v234
    %v305 = vpop.f32.mrf.mxu0
    %v306 = vadd.f32 0.0, %v305
    %v307 = vpop.f32.mrf.mxu0
    %308 = vmatprep.mubr.f32.mxu0 0.0
    %309 = vmatmul.mubr.f32.gmra.mxu0 %v237
    %v310 = vpop.f32.mrf.mxu0
    %v311 = vadd.f32 0.0, %v310
    %v312 = vpop.f32.mrf.mxu0
    %313 = vdwg.mxu0
    %v314 = vadd.f32 %v40, %v306
    %v315 = vadd.f32 %v41, %v311
    %v316 = vadd.f32 %v314, %v52
    %v317 = vadd.f32 %v315, %v53
    %v318 = vsel %vm72, %v316, 0.0
    %319 = vadd.xlane.f32.xlu0 %v318
    %v320 = vpop.xlane.xlu0 %319
    %v321 = vsel %vm72, %v317, 0.0
    %322 = vadd.xlane.f32.xlu0 %v321
    %v323 = vpop.xlane.xlu0 %322
    %v324 = vmul.f32 %v316, %v316
    %v325 = vmul.f32 %v317, %v317
    %v326 = vsel %vm72, %v324, 0.0
    %327 = vadd.xlane.f32.xlu0 %v326
    %v328 = vpop.xlane.xlu0 %327
    %v329 = vsel %vm72, %v325, 0.0
    %330 = vadd.xlane.f32.xlu0 %v329
    %v331 = vpop.xlane.xlu0 %330
    %v332 = vmul.f32 %v320, 0.03125
    %v333 = vmul.f32 %v323, 0.03125
    %v334 = vmul.f32 %v328, 0.03125
    %v335 = vmul.f32 %v331, 0.03125
    %v336 = vmul.f32 %v332, %v332
    %v337 = vmul.f32 %v333, %v333
    %v338 = vsub.f32 %v334, %v336
    %v339 = vsub.f32 %v335, %v337
    %v340 = vsub.f32 %v316, %v332
    %v341 = vsub.f32 %v317, %v333
    %v342 = vadd.f32 %v338, 1e-05
    %v343 = vadd.f32 %v339, 1e-05
    %v344 = vrsqrt.pop %v342
    %v345 = vrsqrt.pop %v343
    %v346 = vmul.f32 %v340, %v344
    %v347 = vmul.f32 %v341, %v345
    %v348 = vlaneseq
    %v349 = vshrl.u32 %v348, 7
    %v350 = vsub.s32 0, %v349
    %v351 = vrot.slane %v44, %v350
    %v352 = vmul.f32 %v346, %v351
    %v353 = vmul.f32 %v347, %v351
    %v354 = vlaneseq
    %v355 = vshrl.u32 %v354, 7
    %v356 = vsub.s32 0, %v355
    %v357 = vrot.slane %v45, %v356
    %v358 = vadd.f32 %v352, %v357
    %v359 = vadd.f32 %v353, %v357
    %v360 = vlaneseq
    %v361 = vshrl.u32 %v360, 7
    %v362 = vsub.s32 0, %v361
    %v363 = vrot.slane %v46, %v362
    %v365 = vsel %vm72, %v358, 0
    %v368 = vsel %vm72, %v359, 0
    %370 = vmatprep.subr.mxu0 0.0
    %371 = vmatpush1.msra.mxu0 0.0
    %372 = vmatprep.subr.mxu0 0.0
    %373 = vmatpush1.msra.mxu0 0.0
    %374 = vmatprep.subr.mxu0 0.0
    %375 = vmatpush1.msra.mxu0 0.0
    %376 = vmatprep.subr.mxu0 0.0
    %377 = vmatpush1.msra.mxu0 0.0
    %378 = vmatprep.subr.mxu0 0.0
    %379 = vmatpush1.msra.mxu0 0.0
    %380 = vmatprep.subr.mxu0 0.0
    %381 = vmatpush1.msra.mxu0 0.0
    %382 = vmatprep.subr.mxu0 0.0
    %383 = vmatpush1.msra.mxu0 0.0
    %384 = vmatprep.subr.mxu0 0.0
    %385 = vmatpush1.msra.mxu0 0.0
    %386 = vmatprep.subr.mxu0 0.0
    %387 = vmatpush1.msra.mxu0 0.0
    %388 = vmatprep.subr.mxu0 0.0
    %389 = vmatpush1.msra.mxu0 0.0
    %390 = vmatprep.subr.mxu0 0.0
    %391 = vmatpush1.msra.mxu0 0.0
    %392 = vmatprep.subr.mxu0 0.0
    %393 = vmatpush1.msra.mxu0 0.0
    %394 = vmatprep.subr.mxu0 0.0
    %395 = vmatpush1.msra.mxu0 %v63
    %396 = vmatprep.subr.mxu0 0.0
    %397 = vmatpush1.msra.mxu0 %v62
    %398 = vmatprep.subr.mxu0 0.0
    %399 = vmatpush1.msra.mxu0 %v61
    %400 = vmatprep.subr.mxu0 0.0
    %401 = vmatpush1.msra.mxu0 %v60
    %402 = vmatprep.subr.mxu0 0.0
    %403 = vmatpush2.msra.mxu0 0.0
    %404 = vmatprep.subr.mxu0 0.0
    %405 = vmatpush2.msra.mxu0 0.0
    %406 = vmatprep.subr.mxu0 0.0
    %407 = vmatpush2.msra.mxu0 0.0
    %408 = vmatprep.subr.mxu0 0.0
    %409 = vmatpush2.msra.mxu0 0.0
    %410 = vmatprep.subr.mxu0 0.0
    %411 = vmatpush2.msra.mxu0 0.0
    %412 = vmatprep.subr.mxu0 0.0
    %413 = vmatpush2.msra.mxu0 0.0
    %414 = vmatprep.subr.mxu0 0.0
    %415 = vmatpush2.msra.mxu0 0.0
    %416 = vmatprep.subr.mxu0 0.0
    %417 = vmatpush2.msra.mxu0 0.0
    %418 = vmatprep.subr.mxu0 0.0
    %419 = vmatpush2.msra.mxu0 0.0
    %420 = vmatprep.subr.mxu0 0.0
    %421 = vmatpush2.msra.mxu0 0.0
    %422 = vmatprep.subr.mxu0 0.0
    %423 = vmatpush2.msra.mxu0 0.0
    %424 = vmatprep.subr.mxu0 0.0
    %425 = vmatpush2.msra.mxu0 0.0
    %426 = vmatprep.subr.mxu0 0.0
    %427 = vmatpush2.msra.mxu0 0.0
    %428 = vmatprep.subr.mxu0 0.0
    %429 = vmatpush2.msra.mxu0 0.0
    %430 = vmatprep.subr.mxu0 0.0
    %431 = vmatpush2.msra.mxu0 0.0
    %432 = vmatprep.subr.mxu0 0.0
    %433 = vmatpush2.msra.mxu0 0.0
    %434 = vmatprep.mubr.f32.mxu0 0.0
    %435 = vmatmul.mubr.f32.gmra.mxu0 %v365
    %v436 = vpop.f32.mrf.mxu0
    %v437 = vadd.f32 %v363, %v436
    %v438 = vpop.f32.mrf.mxu0
    %439 = vmatprep.mubr.f32.mxu0 0.0
    %440 = vmatmul.mubr.f32.gmra.mxu0 %v368
    %v441 = vpop.f32.mrf.mxu0
    %v442 = vadd.f32 %v363, %v441
    %v443 = vpop.f32.mrf.mxu0
    %444 = vdwg.mxu0
    %v445 = vmul.f32 %v437, 0.5
    %v446 = vmul.f32 %v442, 0.5
    %v447 = vmul.f32 %v437, 0.70710677
    %v448 = vmul.f32 %v442, 0.70710677
    %v449 = verf.f32.pop %v447
    %v450 = verf.f32.pop %v448
    %v451 = vadd.f32 %v449, 1.0
    %v452 = vadd.f32 %v450, 1.0
    %v453 = vmul.f32 %v445, %v451
    %v454 = vmul.f32 %v446, %v452
    %vm455 = vcmask 523264
    %v457 = vsel %vm455, %v453, 0
    %v460 = vsel %vm455, %v454, 0
    %462 = vmatprep.subr.mxu0 0.0
    %463 = vmatpush1.msra.mxu0 0.0
    %464 = vmatprep.subr.mxu0 0.0
    %465 = vmatpush1.msra.mxu0 0.0
    %466 = vmatprep.subr.mxu0 0.0
    %467 = vmatpush1.msra.mxu0 0.0
    %468 = vmatprep.subr.mxu0 0.0
    %469 = vmatpush1.msra.mxu0 0.0
    %470 = vmatprep.subr.mxu0 0.0
    %471 = vmatpush1.msra.mxu0 0.0
    %472 = vmatprep.subr.mxu0 0.0
    %473 = vmatpush1.msra.mxu0 0.0
    %474 = vmatprep.subr.mxu0 0.0
    %475 = vmatpush1.msra.mxu0 0.0
    %476 = vmatprep.subr.mxu0 0.0
    %477 = vmatpush1.msra.mxu0 0.0
    %478 = vmatprep.subr.mxu0 0.0
    %479 = vmatpush1.msra.mxu0 %v71
    %480 = vmatprep.subr.mxu0 0.0
    %481 = vmatpush1.msra.mxu0 %v70
    %482 = vmatprep.subr.mxu0 0.0
    %483 = vmatpush1.msra.mxu0 %v69
    %484 = vmatprep.subr.mxu0 0.0
    %485 = vmatpush1.msra.mxu0 %v68
    %486 = vmatprep.subr.mxu0 0.0
    %487 = vmatpush1.msra.mxu0 %v67
    %488 = vmatprep.subr.mxu0 0.0
    %489 = vmatpush1.msra.mxu0 %v66
    %490 = vmatprep.subr.mxu0 0.0
    %491 = vmatpush1.msra.mxu0 %v65
    %492 = vmatprep.subr.mxu0 0.0
    %493 = vmatpush1.msra.mxu0 %v64
    %494 = vmatprep.subr.mxu0 0.0
    %495 = vmatpush2.msra.mxu0 0.0
    %496 = vmatprep.subr.mxu0 0.0
    %497 = vmatpush2.msra.mxu0 0.0
    %498 = vmatprep.subr.mxu0 0.0
    %499 = vmatpush2.msra.mxu0 0.0
    %500 = vmatprep.subr.mxu0 0.0
    %501 = vmatpush2.msra.mxu0 0.0
    %502 = vmatprep.subr.mxu0 0.0
    %503 = vmatpush2.msra.mxu0 0.0
    %504 = vmatprep.subr.mxu0 0.0
    %505 = vmatpush2.msra.mxu0 0.0
    %506 = vmatprep.subr.mxu0 0.0
    %507 = vmatpush2.msra.mxu0 0.0
    %508 = vmatprep.subr.mxu0 0.0
    %509 = vmatpush2.msra.mxu0 0.0
    %510 = vmatprep.subr.mxu0 0.0
    %511 = vmatpush2.msra.mxu0 0.0
    %512 = vmatprep.subr.mxu0 0.0
    %513 = vmatpush2.msra.mxu0 0.0
    %514 = vmatprep.subr.mxu0 0.0
    %515 = vmatpush2.msra.mxu0 0.0
    %516 = vmatprep.subr.mxu0 0.0
    %517 = vmatpush2.msra.mxu0 0.0
    %518 = vmatprep.subr.mxu0 0.0
    %519 = vmatpush2.msra.mxu0 0.0
    %520 = vmatprep.subr.mxu0 0.0
    %521 = vmatpush2.msra.mxu0 0.0
    %522 = vmatprep.subr.mxu0 0.0
    %523 = vmatpush2.msra.mxu0 0.0
    %524 = vmatprep.subr.mxu0 0.0
    %525 = vmatpush2.msra.mxu0 0.0
    %526 = vmatprep.mubr.f32.mxu0 0.0
    %527 = vmatmul.mubr.f32.gmra.mxu0 %v457
    %v528 = vpop.f32.mrf.mxu0
    %v529 = vadd.f32 0.0, %v528
    %v530 = vpop.f32.mrf.mxu0
    %531 = vmatprep.mubr.f32.mxu0 0.0
    %532 = vmatmul.mubr.f32.gmra.mxu0 %v460
    %v533 = vpop.f32.mrf.mxu0
    %v534 = vadd.f32 0.0, %v533
    %v535 = vpop.f32.mrf.mxu0
    %536 = vdwg.mxu0
    %v537 = vadd.f32 %v316, %v529
    %v538 = vadd.f32 %v317, %v534
    %v539 = vlaneseq
    %v540 = vshrl.u32 %v539, 7
    %v541 = vsub.s32 0, %v540
    %v542 = vrot.slane %v47, %v541
    %v543 = vadd.f32 %v537, %v542
    %v544 = vadd.f32 %v538, %v542
    %545 = vst.msk [vmem:[#allocation7] sm:$0xff] %vm72, %v543
    %546 = vst.msk [vmem:[#allocation7 + $0x8] sm:$0xff] %vm72, %v544
    // Predicated region
    $region18: #{tpu_custom_call.1} parent=1 // pred_check
      _
    $region19: #{tpu_custom_call.1} parent=1 // pred_check_branch
      %548 = sbr.rel (0) target = $region21
    $region20: #{tpu_custom_call.1} parent=1 // pred_region
      %s550 = ssub.s32 256, 256
      %551 = vsyncadd [#allocation4], %s550
      %s552 = sshll.u32 [#allocation7], 4
      %s553 = int_to_ptr.vmem [resolvable:$true] %s552
      %558 = dma.vmem_to_hbm [thread:$0]  %s553, 256, %s2, [#allocation4], 128, 128, 8
    $region21: #{tpu_custom_call.1} parent=1 // pred_fallthru
      _
    // Predicated region
    $region22: #{tpu_custom_call.1} parent=1 // pred_check
      _
    $region23: #{tpu_custom_call.1} parent=1 // pred_check_branch
      %560 = sbr.rel (0) target = $region25
    $region24: #{tpu_custom_call.1} parent=1 // pred_region
      %561 = dma.done [#allocation4], 256
    $region25: #{tpu_custom_call.1} parent=1 // pred_fallthru
      _
    %562 = vsyncpa [#allocation3], 1
    %563 = vsyncpa [#allocation6], 1
    %564 = vsyncpa [#allocation4], 1

</llo_original>
